<compile_context>
chip_gen: v7x
topology: tpu7x:2x2x1
jax: 0.10.0
libtpu: 0.0.40
codegen_flags: <defaults>
</compile_context>

<pallas_src>
import numpy as np
import jax
import jax.numpy as jnp
from jax.experimental import pallas as pl
from jax.experimental.pallas import tpu as pltpu

# Small, module-consistent shapes.
B, N, INPUT_DIM, EMBED_DIM, ATTN_DIM = 2, 8, 16, 32, 16
NPAD = 128  # per-bag instance tile: lane-dense (one full vreg lane width)

# ---- packed-parameter slab layout (rows in the weight slab) ----------------
_R_W1 = 0                                # embed[0]   weight^T : (E, D)
_R_W2 = _R_W1 + EMBED_DIM                # embed[2]   weight^T : (E, E)
_R_WVU = _R_W2 + EMBED_DIM               # [V | U]    weight^T : (2A, E)
_R_WC1 = _R_WVU + 2 * ATTN_DIM           # classifier[0] w^T   : (E, E)
_R_WA = _R_WC1 + EMBED_DIM               # attention_weights^T : (1, A)
_R_WC2 = _R_WA + 8                       # classifier[2] w^T   : (1, E)
_W_ROWS = _R_WC2 + 8                     # 8-row aligned slab height
_W_COLS = EMBED_DIM                      # slab width (max weight row length)
_B_ROWS = max(EMBED_DIM, 2 * ATTN_DIM)   # bias slab height
_B_COLS = 8                              # bias slab width (cols 0..4 used)


def attention_mil_kernel(xt_ref, maskb_ref, w_ref, b_ref, out_ref):
    """One bag per grid step; feature-major layout, instances on the lane axis."""
    W = w_ref[...]                      # (W_ROWS, E) packed transposed weights
    Bv = b_ref[...]                     # (B_ROWS, 8) packed bias columns
    xt = xt_ref[...]                    # (D, NPAD)   this bag's (padded) instances

    # static slices of the packed slabs (in-register, tiny)
    w1t = W[_R_W1:_R_W1 + EMBED_DIM, :INPUT_DIM]         # (E, D)
    w2t = W[_R_W2:_R_W2 + EMBED_DIM, :EMBED_DIM]         # (E, E)
    wvut = W[_R_WVU:_R_WVU + 2 * ATTN_DIM, :EMBED_DIM]   # (2A, E) fused V/U
    wc1t = W[_R_WC1:_R_WC1 + EMBED_DIM, :EMBED_DIM]      # (E, E)
    wat = W[_R_WA:_R_WA + 1, :ATTN_DIM]                  # (1, A)
    wc2t = W[_R_WC2:_R_WC2 + 1, :EMBED_DIM]              # (1, E)

    b1 = Bv[:EMBED_DIM, 0:1]                             # (E, 1)
    b2 = Bv[:EMBED_DIM, 1:2]                             # (E, 1)
    bvu = Bv[:2 * ATTN_DIM, 2:3]                         # (2A, 1)
    bc1 = Bv[:EMBED_DIM, 3:4]                            # (E, 1)
    ba = Bv[0:1, 4:5]                                    # (1, 1)
    bc2 = Bv[1:2, 4:5]                                   # (1, 1)

    # ---- embed MLP: Linear -> ReLU -> Linear over this bag's instances -----
    h1 = jnp.maximum(
        jnp.dot(w1t, xt, preferred_element_type=jnp.float32) + b1, 0.0)      # (E, NPAD)
    ht = jnp.dot(w2t, h1, preferred_element_type=jnp.float32) + b2           # (E, NPAD)

    # ---- gated attention: V and U projections fused in one matmul ----------
    g = jnp.dot(wvut, ht, preferred_element_type=jnp.float32) + bvu          # (2A, NPAD)
    gate = jnp.tanh(g[:ATTN_DIM, :]) * jax.nn.sigmoid(g[ATTN_DIM:, :])       # (A, NPAD)

    # ---- attention logits + additive -inf mask (padding & user mask) -------
    logits = (jnp.dot(wat, gate, preferred_element_type=jnp.float32)
              + ba + maskb_ref[...])                                         # (1, NPAD)

    # ---- masked softmax with per-bag max (no cross-bag underflow) ----------
    m = jnp.max(logits, axis=-1, keepdims=True)                              # (1, 1)
    e = jnp.exp(logits - m)                                                  # masked lanes -> 0
    denom = jnp.sum(e, axis=-1, keepdims=True)                               # (1, 1)
    r = pl.reciprocal(denom, approx=True)                                    # EUP slot
    r = r * (2.0 - denom * r)                                                # 1 Newton step
    attn = e * r                                                             # (1, NPAD)

    # ---- attention-weighted pooling: plain lane reduction ------------------
    zt = jnp.sum(ht * attn, axis=-1, keepdims=True)                          # (E, 1)

    # ---- classifier: Linear -> ReLU -> Linear ------------------------------
    c1 = jnp.maximum(
        jnp.dot(wc1t, zt, preferred_element_type=jnp.float32) + bc1, 0.0)    # (E, 1)
    y = jnp.dot(wc2t, c1, preferred_element_type=jnp.float32) + bc2          # (1, 1)

    # ---- merged lane-dense output block: row 0 = attention, row 1 = y_hat --
    out_ref[...] = jnp.concatenate(
        [attn, jnp.broadcast_to(y, (1, NPAD))], axis=0)                      # (2, NPAD)


def pack_params(params):
    """One-time host-side packing of all weights/biases into two f32 slabs."""
    (w1, b1, w2, b2, wv, bv, wu, bu, wa, ba, wc1, bc1, wc2, bc2) = [
        np.asarray(p, np.float32) for p in params]

    W = np.zeros((_W_ROWS, _W_COLS), np.float32)
    W[_R_W1:_R_W1 + EMBED_DIM, :INPUT_DIM] = w1.T
    W[_R_W2:_R_W2 + EMBED_DIM, :EMBED_DIM] = w2.T
    W[_R_WVU:_R_WVU + 2 * ATTN_DIM, :EMBED_DIM] = np.concatenate([wv, wu], axis=1).T
    W[_R_WC1:_R_WC1 + EMBED_DIM, :EMBED_DIM] = wc1.T
    W[_R_WA, :ATTN_DIM] = wa[:, 0]
    W[_R_WC2, :EMBED_DIM] = wc2[:, 0]

    Bm = np.zeros((_B_ROWS, _B_COLS), np.float32)
    Bm[:EMBED_DIM, 0] = b1[0]
    Bm[:EMBED_DIM, 1] = b2[0]
    Bm[:2 * ATTN_DIM, 2] = np.concatenate([bv[0], bu[0]])
    Bm[:EMBED_DIM, 3] = bc1[0]
    Bm[0, 4] = ba[0, 0]
    Bm[1, 4] = bc2[0, 0]
    return jnp.asarray(W), jnp.asarray(Bm)


def attention_mil_forward(x, mask, w_pack, b_pack):
    # Tiny per-call input prep: pad each bag's instance axis to NPAD lanes and
    # fold padding + user mask into one additive -inf bias row.
    x_pad = jnp.zeros((B, NPAD, INPUT_DIM), jnp.float32).at[:, :N, :].set(x)
    xt = x_pad.transpose(2, 0, 1).reshape(INPUT_DIM, B * NPAD)               # (D, B*NPAD)
    mask_pad = jnp.zeros((B, NPAD), mask.dtype).at[:, :N].set(mask)
    mask_bias = jnp.where(mask_pad == 0, -jnp.inf, 0.0).astype(jnp.float32)
    mask_bias = mask_bias.reshape(1, B * NPAD)                               # (1, B*NPAD)

    out = pl.pallas_call(
        attention_mil_kernel,
        out_shape=jax.ShapeDtypeStruct((B, 2, NPAD), jnp.float32),
        grid_spec=pltpu.PrefetchScalarGridSpec(
            num_scalar_prefetch=0,
            grid=(B,),  # one bag per grid step
            in_specs=[
                pl.BlockSpec((INPUT_DIM, NPAD), lambda b: (0, b)),   # this bag's x^T
                pl.BlockSpec((1, NPAD), lambda b: (0, b)),           # this bag's mask bias
                pl.BlockSpec((_W_ROWS, _W_COLS), lambda b: (0, 0)),  # weight slab (shared)
                pl.BlockSpec((_B_ROWS, _B_COLS), lambda b: (0, 0)),  # bias slab (shared)
            ],
            out_specs=pl.BlockSpec((None, 2, NPAD), lambda b: (b, 0, 0)),
        ),
        compiler_params=pltpu.CompilerParams(
            dimension_semantics=("parallel",)),  # bag axis -> both TCs on v7x
    )(xt, mask_bias, w_pack, b_pack)

    y_hat = out[:, 1, 0]          # (B,)
    attn = out[:, 0, :N]          # (B, N)
    return y_hat, attn


def init_params(key):
    """Deterministic PyTorch-style init: U(-1/sqrt(fan_in), 1/sqrt(fan_in))."""
    def linear(k, fan_in, fan_out):
        k1, k2 = jax.random.split(k)
        bound = 1.0 / np.sqrt(fan_in)
        w = jax.random.uniform(k1, (fan_in, fan_out), jnp.float32, -bound, bound)
        b = jax.random.uniform(k2, (1, fan_out), jnp.float32, -bound, bound)
        return w, b

    keys = jax.random.split(key, 7)
    w1, b1 = linear(keys[0], INPUT_DIM, EMBED_DIM)      # embed[0]
    w2, b2 = linear(keys[1], EMBED_DIM, EMBED_DIM)      # embed[2]
    wv, bv = linear(keys[2], EMBED_DIM, ATTN_DIM)       # attention_V
    wu, bu = linear(keys[3], EMBED_DIM, ATTN_DIM)       # attention_U
    wa, ba = linear(keys[4], ATTN_DIM, 1)               # attention_weights
    wc1, bc1 = linear(keys[5], EMBED_DIM, EMBED_DIM)    # classifier[0]
    wc2, bc2 = linear(keys[6], EMBED_DIM, 1)            # classifier[2]
    return (w1, b1, w2, b2, wv, bv, wu, bu, wa, ba, wc1, bc1, wc2, bc2)


def reference_forward(x, mask, params):
    """Pure-JAX reference mirroring the PyTorch module exactly."""
    (w1, b1, w2, b2, wv, bv, wu, bu, wa, ba, wc1, bc1, wc2, bc2) = params
    H = jnp.maximum(x @ w1 + b1, 0.0) @ w2 + b2
    A = jnp.tanh(H @ wv + bv) * jax.nn.sigmoid(H @ wu + bu)
    logits = (A @ wa + ba)[..., 0]
    logits = jnp.where(mask == 0, -jnp.inf, logits)
    attn = jax.nn.softmax(logits, axis=1)
    Z = jnp.sum(H * attn[..., None], axis=1)
    y_hat = (jnp.maximum(Z @ wc1 + bc1, 0.0) @ wc2 + bc2)[:, 0]
    return y_hat, attn


if __name__ == "__main__":
    key = jax.random.PRNGKey(0)
    k_params, k_x = jax.random.split(key)

    params = init_params(k_params)
    w_pack, b_pack = pack_params(params)   # one-time packing, outside the jitted path

    x = jax.random.normal(k_x, (B, N, INPUT_DIM), dtype=jnp.float32)
    # bag 0 fully valid, bag 1 has its last 3 instances masked out.
    # TODO(synk): a fully-masked bag yields NaN attention (same as the PyTorch
    # reference); guard upstream if empty bags can occur.
    mask = jnp.array([[1, 1, 1, 1, 1, 1, 1, 1],
                      [1, 1, 1, 1, 1, 0, 0, 0]], dtype=jnp.int32)

    fwd = jax.jit(attention_mil_forward)
    y_hat, attn = fwd(x, mask, w_pack, b_pack)
    jax.block_until_ready((y_hat, attn))

    y_ref, attn_ref = reference_forward(x, mask, params)
    assert y_hat.shape == (B,) and attn.shape == (B, N)
    np.testing.assert_allclose(np.asarray(y_hat), np.asarray(y_ref), rtol=1e-4, atol=1e-5)
    np.testing.assert_allclose(np.asarray(attn), np.asarray(attn_ref), rtol=1e-4, atol=1e-5)

    print("KERNEL_OK")
</pallas_src>

<mosaic_0001>
module attributes {stable_mosaic.version = 11 : i64} {
  func.func @attention_mil_kernel(%arg0: i32, %arg1: memref<16x128xf32, #tpu.memory_space<vmem>>, %arg2: memref<1x128xf32, #tpu.memory_space<vmem>>, %arg3: memref<144x32xf32, #tpu.memory_space<vmem>>, %arg4: memref<32x8xf32, #tpu.memory_space<vmem>>, %arg5: memref<1x2x128xf32, #tpu.memory_space<vmem>>) attributes {dimension_semantics = [#tpu.dimension_semantics<parallel>], iteration_bounds = array<i64: 2>, scalar_prefetch = 0 : i64, scratch_operands = 0 : i64, tpu.core_type = #tpu.core_type<tc>, window_params = [{transform_indices = @transform_0, window_bounds = array<i64: 16, 128>}, {transform_indices = @transform_1, window_bounds = array<i64: 1, 128>}, {pipeline_mode = #tpu.pipeline_mode<synchronous>, transform_indices = @transform_2, window_bounds = array<i64: 144, 32>}, {pipeline_mode = #tpu.pipeline_mode<synchronous>, transform_indices = @transform_3, window_bounds = array<i64: 32, 8>}, {transform_indices = @transform_4, window_bounds = array<i64: 1, 2, 128>}]} {
    %c0 = arith.constant 0 : index
    %c0_0 = arith.constant 0 : index
    %0 = vector.load %arg3[%c0, %c0_0] : memref<144x32xf32, #tpu.memory_space<vmem>>, vector<144x32xf32>
    %c0_1 = arith.constant 0 : index
    %c0_2 = arith.constant 0 : index
    %1 = vector.load %arg4[%c0_1, %c0_2] : memref<32x8xf32, #tpu.memory_space<vmem>>, vector<32x8xf32>
    %c0_3 = arith.constant 0 : index
    %c0_4 = arith.constant 0 : index
    %2 = vector.load %arg1[%c0_3, %c0_4] : memref<16x128xf32, #tpu.memory_space<vmem>>, vector<16x128xf32>
    %3 = vector.extract_strided_slice %0 {offsets = [0, 0], sizes = [32, 16], strides = [1, 1]} : vector<144x32xf32> to vector<32x16xf32>
    %4 = vector.extract_strided_slice %0 {offsets = [32, 0], sizes = [32, 32], strides = [1, 1]} : vector<144x32xf32> to vector<32x32xf32>
    %5 = vector.extract_strided_slice %0 {offsets = [64, 0], sizes = [32, 32], strides = [1, 1]} : vector<144x32xf32> to vector<32x32xf32>
    %6 = vector.extract_strided_slice %0 {offsets = [96, 0], sizes = [32, 32], strides = [1, 1]} : vector<144x32xf32> to vector<32x32xf32>
    %7 = vector.extract_strided_slice %0 {offsets = [128, 0], sizes = [1, 16], strides = [1, 1]} : vector<144x32xf32> to vector<1x16xf32>
    %8 = vector.extract_strided_slice %0 {offsets = [136, 0], sizes = [1, 32], strides = [1, 1]} : vector<144x32xf32> to vector<1x32xf32>
    %9 = vector.extract_strided_slice %1 {offsets = [0, 0], sizes = [32, 1], strides = [1, 1]} : vector<32x8xf32> to vector<32x1xf32>
    %10 = vector.extract_strided_slice %1 {offsets = [0, 1], sizes = [32, 1], strides = [1, 1]} : vector<32x8xf32> to vector<32x1xf32>
    %11 = vector.extract_strided_slice %1 {offsets = [0, 2], sizes = [32, 1], strides = [1, 1]} : vector<32x8xf32> to vector<32x1xf32>
    %12 = vector.extract_strided_slice %1 {offsets = [0, 3], sizes = [32, 1], strides = [1, 1]} : vector<32x8xf32> to vector<32x1xf32>
    %13 = vector.extract_strided_slice %1 {offsets = [0, 4], sizes = [1, 1], strides = [1, 1]} : vector<32x8xf32> to vector<1x1xf32>
    %14 = vector.extract_strided_slice %1 {offsets = [1, 4], sizes = [1, 1], strides = [1, 1]} : vector<32x8xf32> to vector<1x1xf32>
    %cst = arith.constant dense<0.000000e+00> : vector<32x128xf32>
    %15 = tpu.matmul %3, %2, %cst {dimension_numbers = #tpu.dot_dimension_numbers<[1], [0], [0], [1], [0, 0, 1, 1], [], []>} : vector<32x16xf32>, vector<16x128xf32>, vector<32x128xf32> -> vector<32x128xf32>
    %16 = vector.broadcast %9 : vector<32x1xf32> to vector<32x128xf32>
    %17 = arith.addf %15, %16 : vector<32x128xf32>
    %cst_5 = arith.constant 0.000000e+00 : f32
    %18 = vector.broadcast %cst_5 : f32 to vector<32x128xf32>
    %19 = arith.maximumf %17, %18 : vector<32x128xf32>
    %cst_6 = arith.constant dense<0.000000e+00> : vector<32x128xf32>
    %20 = tpu.matmul %4, %19, %cst_6 {dimension_numbers = #tpu.dot_dimension_numbers<[1], [0], [0], [1], [0, 0, 1, 1], [], []>} : vector<32x32xf32>, vector<32x128xf32>, vector<32x128xf32> -> vector<32x128xf32>
    %21 = vector.broadcast %10 : vector<32x1xf32> to vector<32x128xf32>
    %22 = arith.addf %20, %21 : vector<32x128xf32>
    %cst_7 = arith.constant dense<0.000000e+00> : vector<32x128xf32>
    %23 = tpu.matmul %5, %22, %cst_7 {dimension_numbers = #tpu.dot_dimension_numbers<[1], [0], [0], [1], [0, 0, 1, 1], [], []>} : vector<32x32xf32>, vector<32x128xf32>, vector<32x128xf32> -> vector<32x128xf32>
    %24 = vector.broadcast %11 : vector<32x1xf32> to vector<32x128xf32>
    %25 = arith.addf %23, %24 : vector<32x128xf32>
    %26 = vector.extract_strided_slice %25 {offsets = [0, 0], sizes = [16, 128], strides = [1, 1]} : vector<32x128xf32> to vector<16x128xf32>
    %27 = math.tanh %26 : vector<16x128xf32>
    %28 = vector.extract_strided_slice %25 {offsets = [16, 0], sizes = [16, 128], strides = [1, 1]} : vector<32x128xf32> to vector<16x128xf32>
    %29 = arith.negf %28 : vector<16x128xf32>
    %30 = math.exp %29 : vector<16x128xf32>
    %cst_8 = arith.constant 1.000000e+00 : f32
    %31 = vector.broadcast %cst_8 : f32 to vector<16x128xf32>
    %32 = arith.addf %31, %30 : vector<16x128xf32>
    %33 = arith.divf %31, %32 : vector<16x128xf32>
    %34 = arith.mulf %27, %33 : vector<16x128xf32>
    %cst_9 = arith.constant dense<0.000000e+00> : vector<1x128xf32>
    %35 = tpu.matmul %7, %34, %cst_9 {dimension_numbers = #tpu.dot_dimension_numbers<[1], [0], [0], [1], [0, 0, 1, 1], [], []>} : vector<1x16xf32>, vector<16x128xf32>, vector<1x128xf32> -> vector<1x128xf32>
    %36 = vector.broadcast %13 : vector<1x1xf32> to vector<1x128xf32>
    %37 = arith.addf %35, %36 : vector<1x128xf32>
    %c0_10 = arith.constant 0 : index
    %c0_11 = arith.constant 0 : index
    %38 = vector.load %arg2[%c0_10, %c0_11] : memref<1x128xf32, #tpu.memory_space<vmem>>, vector<1x128xf32>
    %39 = arith.addf %37, %38 : vector<1x128xf32>
    %cst_12 = arith.constant dense<0xFF800000> : vector<1xf32>
    %40 = vector.multi_reduction <maximumf>, %39, %cst_12 [1] : vector<1x128xf32> to vector<1xf32>
    %41 = vector.shape_cast %40 : vector<1xf32> to vector<1x1xf32>
    %42 = vector.broadcast %41 : vector<1x1xf32> to vector<1x128xf32>
    %43 = arith.subf %39, %42 : vector<1x128xf32>
    %44 = math.exp %43 : vector<1x128xf32>
    %cst_13 = arith.constant dense<0.000000e+00> : vector<1xf32>
    %45 = vector.multi_reduction <add>, %44, %cst_13 [1] : vector<1x128xf32> to vector<1xf32>
    %46 = vector.shape_cast %45 : vector<1xf32> to vector<1x1xf32>
    %47 = tpu.reciprocal %46 {approx = true} : vector<1x1xf32> -> vector<1x1xf32>
    %48 = arith.mulf %46, %47 : vector<1x1xf32>
    %cst_14 = arith.constant 2.000000e+00 : f32
    %49 = vector.broadcast %cst_14 : f32 to vector<1x1xf32>
    %50 = arith.subf %49, %48 : vector<1x1xf32>
    %51 = arith.mulf %47, %50 : vector<1x1xf32>
    %52 = vector.broadcast %51 : vector<1x1xf32> to vector<1x128xf32>
    %53 = arith.mulf %44, %52 : vector<1x128xf32>
    %54 = vector.broadcast %53 : vector<1x128xf32> to vector<32x128xf32>
    %55 = arith.mulf %22, %54 : vector<32x128xf32>
    %cst_15 = arith.constant dense<0.000000e+00> : vector<32xf32>
    %56 = vector.multi_reduction <add>, %55, %cst_15 [1] : vector<32x128xf32> to vector<32xf32>
    %57 = vector.shape_cast %56 : vector<32xf32> to vector<32x1xf32>
    %cst_16 = arith.constant dense<0.000000e+00> : vector<32x1xf32>
    %58 = tpu.matmul %6, %57, %cst_16 {dimension_numbers = #tpu.dot_dimension_numbers<[1], [0], [0], [1], [0, 0, 1, 1], [], []>} : vector<32x32xf32>, vector<32x1xf32>, vector<32x1xf32> -> vector<32x1xf32>
    %59 = arith.addf %58, %12 : vector<32x1xf32>
    %cst_17 = arith.constant 0.000000e+00 : f32
    %60 = vector.broadcast %cst_17 : f32 to vector<32x1xf32>
    %61 = arith.maximumf %59, %60 : vector<32x1xf32>
    %cst_18 = arith.constant dense<0.000000e+00> : vector<1x1xf32>
    %62 = tpu.matmul %8, %61, %cst_18 {dimension_numbers = #tpu.dot_dimension_numbers<[1], [0], [0], [1], [0, 0, 1, 1], [], []>} : vector<1x32xf32>, vector<32x1xf32>, vector<1x1xf32> -> vector<1x1xf32>
    %63 = arith.addf %62, %14 : vector<1x1xf32>
    %64 = vector.shape_cast %63 : vector<1x1xf32> to vector<1x1xf32>
    %65 = vector.broadcast %64 : vector<1x1xf32> to vector<1x128xf32>
    %66 = tpu.concatenate %53, %65 in 0 : vector<1x128xf32>, vector<1x128xf32> -> vector<2x128xf32>
    %c0_19 = arith.constant 0 : index
    %c0_20 = arith.constant 0 : index
    %c0_21 = arith.constant 0 : index
    %67 = vector.load %arg5[%c0_19, %c0_20, %c0_21] : memref<1x2x128xf32, #tpu.memory_space<vmem>>, vector<1x2x128xf32>
    %68 = vector.shape_cast %67 : vector<1x2x128xf32> to vector<2x128xf32>
    %69 = vector.shape_cast %66 : vector<2x128xf32> to vector<1x2x128xf32>
    tpu.vector_store %arg5[%c0_19, %c0_20, %c0_21], %69 {strides = array<i32>} : memref<1x2x128xf32, #tpu.memory_space<vmem>>, vector<1x2x128xf32>,
    return
  }
  func.func @transform_0(%arg0: i32) -> (i32, i32) {
    %c0_i32 = arith.constant 0 : i32
    %c0_i32_0 = arith.constant 0 : i32
    return %c0_i32, %arg0 : i32, i32
  }
  func.func @transform_1(%arg0: i32) -> (i32, i32) {
    %c0_i32 = arith.constant 0 : i32
    %c0_i32_0 = arith.constant 0 : i32
    return %c0_i32, %arg0 : i32, i32
  }
  func.func @transform_2(%arg0: i32) -> (i32, i32) {
    %c0_i32 = arith.constant 0 : i32
    %c0_i32_0 = arith.constant 0 : i32
    %c0_i32_1 = arith.constant 0 : i32
    return %c0_i32, %c0_i32_0 : i32, i32
  }
  func.func @transform_3(%arg0: i32) -> (i32, i32) {
    %c0_i32 = arith.constant 0 : i32
    %c0_i32_0 = arith.constant 0 : i32
    %c0_i32_1 = arith.constant 0 : i32
    return %c0_i32, %c0_i32_0 : i32, i32
  }
  func.func @transform_4(%arg0: i32) -> (i32, i32, i32) {
    %c0_i32 = arith.constant 0 : i32
    %c0_i32_0 = arith.constant 0 : i32
    %c0_i32_1 = arith.constant 0 : i32
    return %arg0, %c0_i32, %c0_i32_0 : i32, i32, i32
  }
}

</mosaic_0001>

<llo_original>
// kernel: attention_mil_forward.1
$region0: #{attention_mil_forward.1}
  #allocation0 [shape = 'u32[]', space=smem, size = 0x4, offset = 0x4, fixed_abs, tag = 'smem constant byte address 0x4 - core index']
  #allocation1 [shape = 'u32[144,128]{1,0:T(1,128)}', space=vmem, size = 0x12000, scoped, tag = 'internal scratch']
  %s0 = inlined_call_operand.vmem [shape: f32[16,256], index: 0, kind: input, shape index: {}]
  %s1 = inlined_call_operand.vmem [shape: f32[1,256], index: 1, kind: input, shape index: {}]
  %s2 = inlined_call_operand.vmem [shape: f32[144,32], index: 2, kind: input, shape index: {}]
  %s3 = inlined_call_operand.vmem [shape: f32[32,8], index: 3, kind: input, shape index: {}]
  %s4 = inlined_call_operand.vmem [shape: f32[2,2,128], index: 4, kind: output, shape index: {}]
  %s5 = sld [smem:[#allocation0]]
  $region87: #{attention_mil_forward.1} parent=0
    _
  %s7 = ssub.s32 1, %s5
  %s8 = scalar_select 0, %s7, %s5
  $region1: #{attention_mil_forward.1} parent=0
    #allocation2 [shape = 'u8[16384]{0}', space=vmem, size = 0x4000, scoped, tag = 'input window, operand 0']
    loop: start=0, step=1, limit=4
    $region2: #{attention_mil_forward.1} parent=1 // loop_pre_header
      _
    $region3: #{attention_mil_forward.1} parent=1 // loop_header
      %s10 = sphi 0, %s14
      %p11 = scmp.ge.s32.totalorder %s10, 4
      %s20 = sphi 0, %s22
      %s23 = sphi 0, %s20
      %s24 = sphi 0, %s23
      %s40 = sphi 0, %s24
      %s46 = sphi 0, %s48
      %s49 = sphi 0, %s46
      %s50 = sphi 0, %s49
      %s66 = sphi 0, %s50
      %s70 = sphi 0, %s70
      %s72 = sphi 0, %s70
      %s73 = sphi 0, %s72
      %s87 = sphi 0, %s73
      %s91 = sphi 0, %s91
      %s93 = sphi 0, %s91
      %s94 = sphi 0, %s93
      %s108 = sphi 0, %s94
      %s114 = sphi 0, %s116
      %s117 = sphi 0, %s114
      %s118 = sphi 0, %s117
      %s134 = sphi 0, %s118
    $region4: #{attention_mil_forward.1} parent=1 // loop_header_branch
      %13 = sbr.rel (%p11) target = $region8
    $region5: #{attention_mil_forward.1} parent=1 // loop_body
      %s15 = ssub.s32 %s10, 1
      %s16 = ssub.s32 %s10, 2
      %s17 = sadd.s32 %s10, 1
      %s18 = ssub.s32 %s10, %s17
      %p19 = scmp.eq.s32.totalorder %s18, 0
      %s21 = sadd.s32 %s20, 1
      %s22 = scalar_select %p19, %s20, %s21
      %p25 = pneg %p19
      %p26 = scmp.eq.s32.totalorder %s10, 1
      %p27 = por %p25, %p26
      %p28 = scmp.ne.s32.totalorder %s20, %s23
      %p29 = scmp.eq.s32.totalorder %s10, 0
      %p30 = por %p28, %p29
      %p31 = scmp.ne.s32.totalorder %s20, %s23
      %p32 = scmp.eq.s32.totalorder %s15, 1
      %p33 = por %p31, %p32
      %p34 = scmp.ne.s32.totalorder %s23, %s24
      %p35 = scmp.eq.s32.totalorder %s15, 0
      %p36 = por %p34, %p35
      %p37 = scmp.ne.s32.totalorder %s23, %s24
      %p38 = scmp.eq.s32.totalorder %s16, 1
      %p39 = por %p37, %p38
      %p41 = scmp.ne.s32.totalorder %s24, %s40
      %p42 = scmp.eq.s32.totalorder %s16, 0
      %p43 = por %p41, %p42
      %s44 = ssub.s32 %s10, %s17
      %p45 = scmp.eq.s32.totalorder %s44, 0
      %s47 = sadd.s32 %s46, 1
      %s48 = scalar_select %p45, %s46, %s47
      %p51 = pneg %p45
      %p52 = scmp.eq.s32.totalorder %s10, 1
      %p53 = por %p51, %p52
      %p54 = scmp.ne.s32.totalorder %s46, %s49
      %p55 = scmp.eq.s32.totalorder %s10, 0
      %p56 = por %p54, %p55
      %p57 = scmp.ne.s32.totalorder %s46, %s49
      %p58 = scmp.eq.s32.totalorder %s15, 1
      %p59 = por %p57, %p58
      %p60 = scmp.ne.s32.totalorder %s49, %s50
      %p61 = scmp.eq.s32.totalorder %s15, 0
      %p62 = por %p60, %p61
      %p63 = scmp.ne.s32.totalorder %s49, %s50
      %p64 = scmp.eq.s32.totalorder %s16, 1
      %p65 = por %p63, %p64
      %p67 = scmp.ne.s32.totalorder %s50, %s66
      %p68 = scmp.eq.s32.totalorder %s16, 0
      %p69 = por %p67, %p68
      %s71 = sadd.s32 %s70, 1
      %p74 = scmp.eq.s32.totalorder %s10, 1
      %p75 = scmp.ne.s32.totalorder %s70, %s72
      %p76 = scmp.eq.s32.totalorder %s10, 0
      %p77 = por %p75, %p76
      %p78 = scmp.ne.s32.totalorder %s70, %s72
      %p79 = scmp.eq.s32.totalorder %s15, 1
      %p80 = por %p78, %p79
      %p81 = scmp.ne.s32.totalorder %s72, %s73
      %p82 = scmp.eq.s32.totalorder %s15, 0
      %p83 = por %p81, %p82
      %p84 = scmp.ne.s32.totalorder %s72, %s73
      %p85 = scmp.eq.s32.totalorder %s16, 1
      %p86 = por %p84, %p85
      %p88 = scmp.ne.s32.totalorder %s73, %s87
      %p89 = scmp.eq.s32.totalorder %s16, 0
      %p90 = por %p88, %p89
      %s92 = sadd.s32 %s91, 1
      %p95 = scmp.eq.s32.totalorder %s10, 1
      %p96 = scmp.ne.s32.totalorder %s91, %s93
      %p97 = scmp.eq.s32.totalorder %s10, 0
      %p98 = por %p96, %p97
      %p99 = scmp.ne.s32.totalorder %s91, %s93
      %p100 = scmp.eq.s32.totalorder %s15, 1
      %p101 = por %p99, %p100
      %p102 = scmp.ne.s32.totalorder %s93, %s94
      %p103 = scmp.eq.s32.totalorder %s15, 0
      %p104 = por %p102, %p103
      %p105 = scmp.ne.s32.totalorder %s93, %s94
      %p106 = scmp.eq.s32.totalorder %s16, 1
      %p107 = por %p105, %p106
      %p109 = scmp.ne.s32.totalorder %s94, %s108
      %p110 = scmp.eq.s32.totalorder %s16, 0
      %p111 = por %p109, %p110
      %s112 = ssub.s32 %s10, %s17
      %p113 = scmp.eq.s32.totalorder %s112, 0
      %s115 = sadd.s32 %s114, 1
      %s116 = scalar_select %p113, %s114, %s115
      %p119 = pneg %p113
      %p120 = scmp.eq.s32.totalorder %s10, 1
      %p121 = por %p119, %p120
      %p122 = scmp.ne.s32.totalorder %s114, %s117
      %p123 = scmp.eq.s32.totalorder %s10, 0
      %p124 = por %p122, %p123
      %p125 = scmp.ne.s32.totalorder %s114, %s117
      %p126 = scmp.eq.s32.totalorder %s15, 1
      %p127 = por %p125, %p126
      %p128 = scmp.ne.s32.totalorder %s117, %s118
      %p129 = scmp.eq.s32.totalorder %s15, 0
      %p130 = por %p128, %p129
      %p131 = scmp.ne.s32.totalorder %s117, %s118
      %p132 = scmp.eq.s32.totalorder %s16, 1
      %p133 = por %p131, %p132
      %p135 = scmp.ne.s32.totalorder %s118, %s134
      %p136 = scmp.eq.s32.totalorder %s16, 0
      %p137 = por %p135, %p136
      %p138 = scmp.le.s32.totalorder 1, %s10
      %p139 = scmp.lt.s32.totalorder %s10, 3
      %p140 = pnand %p138, %p139
      %p141 = pneg %p140
      // Predicated region
      $region9: #{attention_mil_forward.1} parent=5 // pred_check
        _
      $region10: #{attention_mil_forward.1} parent=5 // pred_check_branch
        %143 = sbr.rel (%p140) target = $region12
      $region11: #{attention_mil_forward.1} parent=5 // pred_region
        %s144 = ssub.s32 %s10, 1
        // Predicated region
        $region13: #{attention_mil_forward.1} parent=11 // pred_check
          %p145 = pneg %p83
        $region14: #{attention_mil_forward.1} parent=11 // pred_check_branch
          %147 = sbr.rel (%p145) target = $region16
        $region15: #{attention_mil_forward.1} parent=11 // pred_region
          _
        $region16: #{attention_mil_forward.1} parent=11 // pred_fallthru
          _
        // Predicated region
        $region17: #{attention_mil_forward.1} parent=11 // pred_check
          %p148 = pneg %p104
        $region18: #{attention_mil_forward.1} parent=11 // pred_check_branch
          %150 = sbr.rel (%p148) target = $region20
        $region19: #{attention_mil_forward.1} parent=11 // pred_region
          _
        $region20: #{attention_mil_forward.1} parent=11 // pred_fallthru
          _
      $region12: #{attention_mil_forward.1} parent=5 // pred_fallthru
        _
      %p151 = scmp.lt.s32.totalorder %s10, 2
      // Predicated region
      $region21: #{attention_mil_forward.1} parent=5 // pred_check
        %p152 = pneg %p151
      $region22: #{attention_mil_forward.1} parent=5 // pred_check_branch
        %154 = sbr.rel (%p152) target = $region24
      $region23: #{attention_mil_forward.1} parent=5 // pred_region
        // Predicated region
        $region25: #{attention_mil_forward.1} parent=23 // pred_check
          %p155 = pneg %p30
        $region26: #{attention_mil_forward.1} parent=23 // pred_check_branch
          %157 = sbr.rel (%p155) target = $region28
        $region27: #{attention_mil_forward.1} parent=23 // pred_region
          %s158 = sand.u32 %s20, 1
          %s159 = sand.u32 %s20, 1
          %s160 = smul.addr %s159, 16
          %s161 = scalar_lea.vmem [#allocation2], %s160
          %s162 = smul.addr %s10, 8
          %s163 = scalar_lea.vmem %s0, %s162
          // Predicated region
          $region29: #{attention_mil_forward.1} parent=27 // pred_check
            _
          $region30: #{attention_mil_forward.1} parent=27 // pred_check_branch
            %165 = sbr.rel (0) target = $region32
          $region31: #{attention_mil_forward.1} parent=27 // pred_region
            // Predicated region
            $region33: #{attention_mil_forward.1} parent=31 // pred_check
              _
            $region34: #{attention_mil_forward.1} parent=31 // pred_check_branch
              %167 = sbr.rel (0) target = $region36
            $region35: #{attention_mil_forward.1} parent=31 // pred_region
              // Predicated region
              $region48: #{attention_mil_forward.1} parent=35 // pred_check
                _
              $region49: #{attention_mil_forward.1} parent=35 // pred_check_branch
                %184 = sbr.rel (0) target = $region51
              $region50: #{attention_mil_forward.1} parent=35 // pred_region
                loop: start=0, step=1, limit=1
                $region52: #{attention_mil_forward.1} parent=50 // loop_pre_header
                  _
                $region53: #{attention_mil_forward.1} parent=50 // loop_header
                  %s186 = sphi 0, %s190
                  %p187 = scmp.ge.s32.totalorder %s186, 1
                  %s191 = sphi %s163, %s163
                  %s192 = sphi %s161, %s161
                $region54: #{attention_mil_forward.1} parent=50 // loop_header_branch
                  %189 = sbr.rel (%p187) target = $region58
                $region55: #{attention_mil_forward.1} parent=50 // loop_body
                  %v193 = vld [vmem:[%s191] sm:$0xff]
                  %194 = vst [vmem:[%s192] sm:$0xff] %v193
                  %v195 = vld [vmem:[%s191 + $0x10] sm:$0xff]
                  %196 = vst [vmem:[%s192 + $0x8] sm:$0xff] %v195
                $region56: #{attention_mil_forward.1} parent=50 // loop_footer
                  %s190 = sadd.s32 1, %s186
                $region57: #{attention_mil_forward.1} parent=50 // loop_footer_branch
                  %185 = sbr.rel target = $region53
                $region58: #{attention_mil_forward.1} parent=50 // loop_exit
                  _
              $region51: #{attention_mil_forward.1} parent=35 // pred_fallthru
                _
              // Predicated region
              $region59: #{attention_mil_forward.1} parent=35 // pred_check
                _
              $region60: #{attention_mil_forward.1} parent=35 // pred_check_branch
                %198 = sbr.rel target = $region62
              $region61: #{attention_mil_forward.1} parent=35 // pred_region
                _
              $region62: #{attention_mil_forward.1} parent=35 // pred_fallthru
                _
            $region36: #{attention_mil_forward.1} parent=31 // pred_fallthru
              _
            // Predicated region
            $region37: #{attention_mil_forward.1} parent=31 // pred_check
              _
            $region38: #{attention_mil_forward.1} parent=31 // pred_check_branch
              %169 = sbr.rel target = $region40
            $region39: #{attention_mil_forward.1} parent=31 // pred_region
              loop: start=0, step=1, limit=1
              $region41: #{attention_mil_forward.1} parent=39 // loop_pre_header
                _
              $region42: #{attention_mil_forward.1} parent=39 // loop_header
                %s172 = sphi 0, %s176
                %p173 = scmp.ge.s32.totalorder %s172, 1
                %s177 = sphi %s163, %s163
                %s178 = sphi %s161, %s161
              $region43: #{attention_mil_forward.1} parent=39 // loop_header_branch
                %175 = sbr.rel (%p173) target = $region47
              $region44: #{attention_mil_forward.1} parent=39 // loop_body
                %v179 = vld [vmem:[%s177] sm:$0xff]
                %180 = vst [vmem:[%s178] sm:$0xff] %v179
                %v181 = vld [vmem:[%s177 + $0x10] sm:$0xff]
                %182 = vst [vmem:[%s178 + $0x8] sm:$0xff] %v181
              $region45: #{attention_mil_forward.1} parent=39 // loop_footer
                %s176 = sadd.s32 1, %s172
              $region46: #{attention_mil_forward.1} parent=39 // loop_footer_branch
                %171 = sbr.rel target = $region42
              $region47: #{attention_mil_forward.1} parent=39 // loop_exit
                _
            $region40: #{attention_mil_forward.1} parent=31 // pred_fallthru
              _
          $region32: #{attention_mil_forward.1} parent=27 // pred_fallthru
            _
          %199 = vnop
        $region28: #{attention_mil_forward.1} parent=23 // pred_fallthru
          _
        // Predicated region
        $region63: #{attention_mil_forward.1} parent=23 // pred_check
          %p200 = pneg %p56
        $region64: #{attention_mil_forward.1} parent=23 // pred_check_branch
          %202 = sbr.rel (%p200) target = $region66
        $region65: #{attention_mil_forward.1} parent=23 // pred_region
          %p203 = scmp.lt.s32.totalorder %s10, 1
          %s204 = scalar_select %p203, %s10, 1
          %s205 = scalar_lea.vmem %s1, %s204
        $region66: #{attention_mil_forward.1} parent=23 // pred_fallthru
          _
      $region24: #{attention_mil_forward.1} parent=5 // pred_fallthru
        _
      %p206 = scmp.le.s32.totalorder 1, %s10
      %p207 = scmp.lt.s32.totalorder %s10, 3
      %p208 = pnand %p206, %p207
      %p209 = pneg %p208
      // Predicated region
      $region67: #{attention_mil_forward.1} parent=5 // pred_check
        _
      $region68: #{attention_mil_forward.1} parent=5 // pred_check_branch
        %211 = sbr.rel (%p208) target = $region70
      $region69: #{attention_mil_forward.1} parent=5 // pred_region
        %s212 = ssub.s32 %s10, 1
        %s213 = sand.u32 %s23, 1
        %s214 = sand.u32 %s23, 1
        %s215 = smul.addr %s214, 16
        %s216 = scalar_lea.vmem [#allocation2], %s215
        // Predicated region
        $region71: #{attention_mil_forward.1} parent=69 // pred_check
          %p217 = pneg %p36
        $region72: #{attention_mil_forward.1} parent=69 // pred_check_branch
          %219 = sbr.rel (%p217) target = $region74
        $region73: #{attention_mil_forward.1} parent=69 // pred_region
          _
        $region74: #{attention_mil_forward.1} parent=69 // pred_fallthru
          _
        %s220 = sand.u32 %s23, 1
        %s221 = sand.u32 %s23, 1
        %s222 = smul.addr %s221, 16
        %s223 = scalar_lea.vmem [#allocation2], %s222
        %p224 = pneg %p36
        %p225 = pneg %p33
        %p226 = scmp.lt.s32.totalorder %s15, 1
        %s227 = scalar_select %p226, %s15, 1
        %s228 = scalar_lea.vmem %s1, %s227
        %p229 = pneg %p62
        %p230 = pneg %p59
        %p231 = pneg %p83
        %p232 = pneg %p80
        %p233 = pneg %p104
        %p234 = pneg %p101
        %p235 = pneg %p130
        %p236 = pneg %p127
        %p237 = scmp.lt.s32.totalorder %s15, 1
        %s238 = scalar_select %p237, %s15, 1
        %s239 = smul.addr %s238, 2
        %s240 = scalar_lea.vmem %s4, %s239
        %p241 = scmp.lt.s32.totalorder %s15, 1
        %s242 = scalar_select %p241, %s15, 1
        %s243 = scalar_lea.vmem %s1, %s242
        %p244 = scmp.lt.s32.totalorder %s15, 1
        %s245 = scalar_select %p244, %s15, 1
        %s246 = smul.addr %s245, 2
        %s247 = scalar_lea.vmem %s4, %s246
        %v248 = vld [vmem:[%s2] sm:$0xff]
        %v249 = vld [vmem:[%s2 + $0x8] sm:$0xff]
        %v250 = vld [vmem:[%s2 + $0x10] sm:$0xff]
        %v251 = vld [vmem:[%s2 + $0x18] sm:$0xff]
        %v252 = vld [vmem:[%s2 + $0x20] sm:$0xff]
        %v253 = vld [vmem:[%s2 + $0x28] sm:$0xff]
        %v254 = vld [vmem:[%s2 + $0x30] sm:$0xff]
        %v255 = vld [vmem:[%s2 + $0x38] sm:$0xff]
        %v256 = vld [vmem:[%s2 + $0x40] sm:$0xff]
        %v257 = vld [vmem:[%s2 + $0x48] sm:$0xff]
        %v258 = vld [vmem:[%s2 + $0x50] sm:$0xff]
        %v259 = vld [vmem:[%s2 + $0x58] sm:$0xff]
        %v260 = vld [vmem:[%s2 + $0x60] sm:$0xff]
        %v261 = vld [vmem:[%s2 + $0x68] sm:$0xff]
        %v262 = vld [vmem:[%s2 + $0x70] sm:$0xff]
        %v263 = vld [vmem:[%s2 + $0x78] sm:$0xff]
        %v264 = vld [vmem:[%s2 + $0x80] sm:$0xff]
        %v265 = vld [vmem:[%s2 + $0x88] sm:$0xff]
        %v266 = vld [vmem:[%s3] sm:$0xff]
        %v267 = vld [vmem:[%s3 + $0x8] sm:$0xff]
        %v268 = vld [vmem:[%s3 + $0x10] sm:$0xff]
        %v269 = vld [vmem:[%s3 + $0x18] sm:$0xff]
        %v270 = vld [vmem:[%s216] sm:$0xff]
        %v271 = vld [vmem:[%s216 + $0x8] sm:$0xff]
        %273 = vset.pattern.permute.xlu0 0
        %274 = vperm.xlu0 %273, %v266
        %v275 = vpop.permute.xlu0 %274
        %278 = vset.pattern.permute.xlu0 0
        %279 = vperm.xlu0 %278, %v267
        %v280 = vpop.permute.xlu0 %279
        %283 = vset.pattern.permute.xlu0 0
        %284 = vperm.xlu0 %283, %v268
        %v285 = vpop.permute.xlu0 %284
        %288 = vset.pattern.permute.xlu0 0
        %289 = vperm.xlu0 %288, %v269
        %v290 = vpop.permute.xlu0 %289
        %vm292 = vcmask 130048
        %v294 = vsel %vm292, %v248, 0
        %v297 = vsel %vm292, %v249, 0
        %v300 = vsel %vm292, %v250, 0
        %v303 = vsel %vm292, %v251, 0
        %305 = vmatprep.subr.mxu0 0.0
        %306 = vmatpush1.msra.mxu0 %v270
        %307 = vmatprep.subr.mxu0 0.0
        %308 = vmatpush1.msra.mxu0 %v271
        %309 = vmatprep.subr.mxu0 0.0
        %310 = vmatpush1.msra.mxu0 0.0
        %311 = vmatprep.subr.mxu0 0.0
        %312 = vmatpush1.msra.mxu0 0.0
        %313 = vmatprep.subr.mxu0 0.0
        %314 = vmatpush1.msra.mxu0 0.0
        %315 = vmatprep.subr.mxu0 0.0
        %316 = vmatpush1.msra.mxu0 0.0
        %317 = vmatprep.subr.mxu0 0.0
        %318 = vmatpush1.msra.mxu0 0.0
        %319 = vmatprep.subr.mxu0 0.0
        %320 = vmatpush1.msra.mxu0 0.0
        %321 = vmatprep.subr.mxu0 0.0
        %322 = vmatpush1.msra.mxu0 0.0
        %323 = vmatprep.subr.mxu0 0.0
        %324 = vmatpush1.msra.mxu0 0.0
        %325 = vmatprep.subr.mxu0 0.0
        %326 = vmatpush1.msra.mxu0 0.0
        %327 = vmatprep.subr.mxu0 0.0
        %328 = vmatpush1.msra.mxu0 0.0
        %329 = vmatprep.subr.mxu0 0.0
        %330 = vmatpush1.msra.mxu0 0.0
        %331 = vmatprep.subr.mxu0 0.0
        %332 = vmatpush1.msra.mxu0 0.0
        %333 = vmatprep.subr.mxu0 0.0
        %334 = vmatpush1.msra.mxu0 0.0
        %335 = vmatprep.subr.mxu0 0.0
        %336 = vmatpush1.msra.mxu0 0.0
        %337 = vmatprep.subr.mxu0 0.0
        %338 = vmatpush1.msra.mxu0 0.0
        %339 = vmatprep.subr.mxu0 0.0
        %340 = vmatpush1.msra.mxu0 0.0
        %341 = vmatprep.subr.mxu0 0.0
        %342 = vmatpush1.msra.mxu0 0.0
        %343 = vmatprep.subr.mxu0 0.0
        %344 = vmatpush1.msra.mxu0 0.0
        %345 = vmatprep.subr.mxu0 0.0
        %346 = vmatpush1.msra.mxu0 0.0
        %347 = vmatprep.subr.mxu0 0.0
        %348 = vmatpush1.msra.mxu0 0.0
        %349 = vmatprep.subr.mxu0 0.0
        %350 = vmatpush1.msra.mxu0 0.0
        %351 = vmatprep.subr.mxu0 0.0
        %352 = vmatpush1.msra.mxu0 0.0
        %353 = vmatprep.subr.mxu0 0.0
        %354 = vmatpush1.msra.mxu0 0.0
        %355 = vmatprep.subr.mxu0 0.0
        %356 = vmatpush1.msra.mxu0 0.0
        %357 = vmatprep.subr.mxu0 0.0
        %358 = vmatpush1.msra.mxu0 0.0
        %359 = vmatprep.subr.mxu0 0.0
        %360 = vmatpush1.msra.mxu0 0.0
        %361 = vmatprep.subr.mxu0 0.0
        %362 = vmatpush1.msra.mxu0 0.0
        %363 = vmatprep.subr.mxu0 0.0
        %364 = vmatpush1.msra.mxu0 0.0
        %365 = vmatprep.subr.mxu0 0.0
        %366 = vmatpush1.msra.mxu0 0.0
        %367 = vmatprep.subr.mxu0 0.0
        %368 = vmatpush1.msra.mxu0 0.0
        %369 = vmatprep.mubr.f32.mxu0 0.0
        %370 = vmatmul.mubr.f32.gmra.mrb[0].mxu0 %v294
        %v371 = vpop.f32.mrb[0].mxu0
        %v372 = vadd.f32 %v275, %v371
        %v373 = vpop.f32.mrb[0].mxu0
        %374 = vmatprep.mubr.f32.mxu0 0.0
        %375 = vmatmul.mubr.f32.gmra.mrb[0].mxu0 %v297
        %v376 = vpop.f32.mrb[0].mxu0
        %v377 = vadd.f32 %v280, %v376
        %v378 = vpop.f32.mrb[0].mxu0
        %379 = vmatprep.mubr.f32.mxu0 0.0
        %380 = vmatmul.mubr.f32.gmra.mrb[0].mxu0 %v300
        %v381 = vpop.f32.mrb[0].mxu0
        %v382 = vadd.f32 %v285, %v381
        %v383 = vpop.f32.mrb[0].mxu0
        %384 = vmatprep.mubr.f32.mxu0 0.0
        %385 = vmatmul.mubr.f32.gmra.mrb[0].mxu0 %v303
        %v386 = vpop.f32.mrb[0].mxu0
        %v387 = vadd.f32 %v290, %v386
        %v388 = vpop.f32.mrb[0].mxu0
        %389 = vdwg.mxu0
        %v390 = vmax.f32 %v372, 0.0
        %v391 = vmax.f32 %v377, 0.0
        %v392 = vmax.f32 %v382, 0.0
        %v393 = vmax.f32 %v387, 0.0
        %394 = vset.pattern.permute.xlu0 1
        %395 = vperm.xlu0 %394, %v266
        %v396 = vpop.permute.xlu0 %395
        %398 = vset.pattern.permute.xlu0 1
        %399 = vperm.xlu0 %398, %v267
        %v400 = vpop.permute.xlu0 %399
        %402 = vset.pattern.permute.xlu0 1
        %403 = vperm.xlu0 %402, %v268
        %v404 = vpop.permute.xlu0 %403
        %406 = vset.pattern.permute.xlu0 1
        %407 = vperm.xlu0 %406, %v269
        %v408 = vpop.permute.xlu0 %407
        %vm410 = vcmask 261120
        %v412 = vsel %vm410, %v252, 0
        %v415 = vsel %vm410, %v253, 0
        %v418 = vsel %vm410, %v254, 0
        %v421 = vsel %vm410, %v255, 0
        %423 = vmatprep.subr.mxu0 0.0
        %424 = vmatpush1.msra.mxu0 %v390
        %425 = vmatprep.subr.mxu0 0.0
        %426 = vmatpush1.msra.mxu0 %v391
        %427 = vmatprep.subr.mxu0 0.0
        %428 = vmatpush1.msra.mxu0 %v392
        %429 = vmatprep.subr.mxu0 0.0
        %430 = vmatpush1.msra.mxu0 %v393
        %431 = vmatprep.subr.mxu0 0.0
        %432 = vmatpush1.msra.mxu0 0.0
        %433 = vmatprep.subr.mxu0 0.0
        %434 = vmatpush1.msra.mxu0 0.0
        %435 = vmatprep.subr.mxu0 0.0
        %436 = vmatpush1.msra.mxu0 0.0
        %437 = vmatprep.subr.mxu0 0.0
        %438 = vmatpush1.msra.mxu0 0.0
        %439 = vmatprep.subr.mxu0 0.0
        %440 = vmatpush1.msra.mxu0 0.0
        %441 = vmatprep.subr.mxu0 0.0
        %442 = vmatpush1.msra.mxu0 0.0
        %443 = vmatprep.subr.mxu0 0.0
        %444 = vmatpush1.msra.mxu0 0.0
        %445 = vmatprep.subr.mxu0 0.0
        %446 = vmatpush1.msra.mxu0 0.0
        %447 = vmatprep.subr.mxu0 0.0
        %448 = vmatpush1.msra.mxu0 0.0
        %449 = vmatprep.subr.mxu0 0.0
        %450 = vmatpush1.msra.mxu0 0.0
        %451 = vmatprep.subr.mxu0 0.0
        %452 = vmatpush1.msra.mxu0 0.0
        %453 = vmatprep.subr.mxu0 0.0
        %454 = vmatpush1.msra.mxu0 0.0
        %455 = vmatprep.subr.mxu0 0.0
        %456 = vmatpush1.msra.mxu0 0.0
        %457 = vmatprep.subr.mxu0 0.0
        %458 = vmatpush1.msra.mxu0 0.0
        %459 = vmatprep.subr.mxu0 0.0
        %460 = vmatpush1.msra.mxu0 0.0
        %461 = vmatprep.subr.mxu0 0.0
        %462 = vmatpush1.msra.mxu0 0.0
        %463 = vmatprep.subr.mxu0 0.0
        %464 = vmatpush1.msra.mxu0 0.0
        %465 = vmatprep.subr.mxu0 0.0
        %466 = vmatpush1.msra.mxu0 0.0
        %467 = vmatprep.subr.mxu0 0.0
        %468 = vmatpush1.msra.mxu0 0.0
        %469 = vmatprep.subr.mxu0 0.0
        %470 = vmatpush1.msra.mxu0 0.0
        %471 = vmatprep.subr.mxu0 0.0
        %472 = vmatpush1.msra.mxu0 0.0
        %473 = vmatprep.subr.mxu0 0.0
        %474 = vmatpush1.msra.mxu0 0.0
        %475 = vmatprep.subr.mxu0 0.0
        %476 = vmatpush1.msra.mxu0 0.0
        %477 = vmatprep.subr.mxu0 0.0
        %478 = vmatpush1.msra.mxu0 0.0
        %479 = vmatprep.subr.mxu0 0.0
        %480 = vmatpush1.msra.mxu0 0.0
        %481 = vmatprep.subr.mxu0 0.0
        %482 = vmatpush1.msra.mxu0 0.0
        %483 = vmatprep.subr.mxu0 0.0
        %484 = vmatpush1.msra.mxu0 0.0
        %485 = vmatprep.subr.mxu0 0.0
        %486 = vmatpush1.msra.mxu0 0.0
        %487 = vmatprep.mubr.f32.mxu0 0.0
        %488 = vmatmul.mubr.f32.gmra.mrb[0].mxu0 %v412
        %v489 = vpop.f32.mrb[0].mxu0
        %v490 = vadd.f32 %v396, %v489
        %v491 = vpop.f32.mrb[0].mxu0
        %492 = vmatprep.mubr.f32.mxu0 0.0
        %493 = vmatmul.mubr.f32.gmra.mrb[0].mxu0 %v415
        %v494 = vpop.f32.mrb[0].mxu0
        %v495 = vadd.f32 %v400, %v494
        %v496 = vpop.f32.mrb[0].mxu0
        %497 = vmatprep.mubr.f32.mxu0 0.0
        %498 = vmatmul.mubr.f32.gmra.mrb[0].mxu0 %v418
        %v499 = vpop.f32.mrb[0].mxu0
        %v500 = vadd.f32 %v404, %v499
        %v501 = vpop.f32.mrb[0].mxu0
        %502 = vmatprep.mubr.f32.mxu0 0.0
        %503 = vmatmul.mubr.f32.gmra.mrb[0].mxu0 %v421
        %v504 = vpop.f32.mrb[0].mxu0
        %v505 = vadd.f32 %v408, %v504
        %v506 = vpop.f32.mrb[0].mxu0
        %507 = vdwg.mxu0
        %508 = vset.pattern.permute.xlu0 2
        %509 = vperm.xlu0 %508, %v266
        %v510 = vpop.permute.xlu0 %509
        %512 = vset.pattern.permute.xlu0 2
        %513 = vperm.xlu0 %512, %v267
        %v514 = vpop.permute.xlu0 %513
        %516 = vset.pattern.permute.xlu0 2
        %517 = vperm.xlu0 %516, %v268
        %v518 = vpop.permute.xlu0 %517
        %520 = vset.pattern.permute.xlu0 2
        %521 = vperm.xlu0 %520, %v269
        %v522 = vpop.permute.xlu0 %521
        %v525 = vsel %vm410, %v256, 0
        %v528 = vsel %vm410, %v257, 0
        %v531 = vsel %vm410, %v258, 0
        %v534 = vsel %vm410, %v259, 0
        %536 = vmatprep.subr.mxu0 0.0
        %537 = vmatpush1.msra.mxu0 %v490
        %538 = vmatprep.subr.mxu0 0.0
        %539 = vmatpush1.msra.mxu0 %v495
        %540 = vmatprep.subr.mxu0 0.0
        %541 = vmatpush1.msra.mxu0 %v500
        %542 = vmatprep.subr.mxu0 0.0
        %543 = vmatpush1.msra.mxu0 %v505
        %544 = vmatprep.subr.mxu0 0.0
        %545 = vmatpush1.msra.mxu0 0.0
        %546 = vmatprep.subr.mxu0 0.0
        %547 = vmatpush1.msra.mxu0 0.0
        %548 = vmatprep.subr.mxu0 0.0
        %549 = vmatpush1.msra.mxu0 0.0
        %550 = vmatprep.subr.mxu0 0.0
        %551 = vmatpush1.msra.mxu0 0.0
        %552 = vmatprep.subr.mxu0 0.0
        %553 = vmatpush1.msra.mxu0 0.0
        %554 = vmatprep.subr.mxu0 0.0
        %555 = vmatpush1.msra.mxu0 0.0
        %556 = vmatprep.subr.mxu0 0.0
        %557 = vmatpush1.msra.mxu0 0.0
        %558 = vmatprep.subr.mxu0 0.0
        %559 = vmatpush1.msra.mxu0 0.0
        %560 = vmatprep.subr.mxu0 0.0
        %561 = vmatpush1.msra.mxu0 0.0
        %562 = vmatprep.subr.mxu0 0.0
        %563 = vmatpush1.msra.mxu0 0.0
        %564 = vmatprep.subr.mxu0 0.0
        %565 = vmatpush1.msra.mxu0 0.0
        %566 = vmatprep.subr.mxu0 0.0
        %567 = vmatpush1.msra.mxu0 0.0
        %568 = vmatprep.subr.mxu0 0.0
        %569 = vmatpush1.msra.mxu0 0.0
        %570 = vmatprep.subr.mxu0 0.0
        %571 = vmatpush1.msra.mxu0 0.0
        %572 = vmatprep.subr.mxu0 0.0
        %573 = vmatpush1.msra.mxu0 0.0
        %574 = vmatprep.subr.mxu0 0.0
        %575 = vmatpush1.msra.mxu0 0.0
        %576 = vmatprep.subr.mxu0 0.0
        %577 = vmatpush1.msra.mxu0 0.0
        %578 = vmatprep.subr.mxu0 0.0
        %579 = vmatpush1.msra.mxu0 0.0
        %580 = vmatprep.subr.mxu0 0.0
        %581 = vmatpush1.msra.mxu0 0.0
        %582 = vmatprep.subr.mxu0 0.0
        %583 = vmatpush1.msra.mxu0 0.0
        %584 = vmatprep.subr.mxu0 0.0
        %585 = vmatpush1.msra.mxu0 0.0
        %586 = vmatprep.subr.mxu0 0.0
        %587 = vmatpush1.msra.mxu0 0.0
        %588 = vmatprep.subr.mxu0 0.0
        %589 = vmatpush1.msra.mxu0 0.0
        %590 = vmatprep.subr.mxu0 0.0
        %591 = vmatpush1.msra.mxu0 0.0
        %592 = vmatprep.subr.mxu0 0.0
        %593 = vmatpush1.msra.mxu0 0.0
        %594 = vmatprep.subr.mxu0 0.0
        %595 = vmatpush1.msra.mxu0 0.0
        %596 = vmatprep.subr.mxu0 0.0
        %597 = vmatpush1.msra.mxu0 0.0
        %598 = vmatprep.subr.mxu0 0.0
        %599 = vmatpush1.msra.mxu0 0.0
        %600 = vmatprep.mubr.f32.mxu0 0.0
        %601 = vmatmul.mubr.f32.gmra.mrb[0].mxu0 %v525
        %v602 = vpop.f32.mrb[0].mxu0
        %v603 = vadd.f32 %v510, %v602
        %v604 = vpop.f32.mrb[0].mxu0
        %605 = vmatprep.mubr.f32.mxu0 0.0
        %606 = vmatmul.mubr.f32.gmra.mrb[0].mxu0 %v528
        %v607 = vpop.f32.mrb[0].mxu0
        %v608 = vadd.f32 %v514, %v607
        %v609 = vpop.f32.mrb[0].mxu0
        %610 = vmatprep.mubr.f32.mxu0 0.0
        %611 = vmatmul.mubr.f32.gmra.mrb[0].mxu0 %v531
        %v612 = vpop.f32.mrb[0].mxu0
        %v613 = vadd.f32 %v518, %v612
        %v614 = vpop.f32.mrb[0].mxu0
        %615 = vmatprep.mubr.f32.mxu0 0.0
        %616 = vmatmul.mubr.f32.gmra.mrb[0].mxu0 %v534
        %v617 = vpop.f32.mrb[0].mxu0
        %v618 = vadd.f32 %v522, %v617
        %v619 = vpop.f32.mrb[0].mxu0
        %620 = vdwg.mxu0
        %v621 = vtanh.pop %v603
        %v622 = vtanh.pop %v608
        %v623 = vxor.u32 %v613, 2147483648
        %v624 = vxor.u32 %v618, 2147483648
        %v625 = vmul.f32 %v623, 1.442695
        %v626 = vpow.pop %v625
        %v627 = vmul.f32 %v624, 1.442695
        %v628 = vpow.pop %v627
        %v629 = vadd.f32 %v626, 1.0
        %v630 = vadd.f32 %v628, 1.0
        %v631 = vrcp.pop %v629
        %v632 = vmul.f32 1.0, %v631
        %v633 = vrcp.pop %v630
        %v634 = vmul.f32 1.0, %v633
        %v635 = vmul.f32 %v621, %v632
        %v636 = vmul.f32 %v622, %v634
        %637 = vset.pattern.permute.xlu0 4
        %638 = vperm.xlu0 %637, %v266
        %v639 = vpop.permute.xlu0 %638
        %v642 = vsel %vm292, %v264, 0
        %644 = vmatprep.subr.mxu0 0.0
        %645 = vmatpush1.msra.mxu0 %v635
        %646 = vmatprep.subr.mxu0 0.0
        %647 = vmatpush1.msra.mxu0 %v636
        %648 = vmatprep.subr.mxu0 0.0
        %649 = vmatpush1.msra.mxu0 0.0
        %650 = vmatprep.subr.mxu0 0.0
        %651 = vmatpush1.msra.mxu0 0.0
        %652 = vmatprep.subr.mxu0 0.0
        %653 = vmatpush1.msra.mxu0 0.0
        %654 = vmatprep.subr.mxu0 0.0
        %655 = vmatpush1.msra.mxu0 0.0
        %656 = vmatprep.subr.mxu0 0.0
        %657 = vmatpush1.msra.mxu0 0.0
        %658 = vmatprep.subr.mxu0 0.0
        %659 = vmatpush1.msra.mxu0 0.0
        %660 = vmatprep.subr.mxu0 0.0
        %661 = vmatpush1.msra.mxu0 0.0
        %662 = vmatprep.subr.mxu0 0.0
        %663 = vmatpush1.msra.mxu0 0.0
        %664 = vmatprep.subr.mxu0 0.0
        %665 = vmatpush1.msra.mxu0 0.0
        %666 = vmatprep.subr.mxu0 0.0
        %667 = vmatpush1.msra.mxu0 0.0
        %668 = vmatprep.subr.mxu0 0.0
        %669 = vmatpush1.msra.mxu0 0.0
        %670 = vmatprep.subr.mxu0 0.0
        %671 = vmatpush1.msra.mxu0 0.0
        %672 = vmatprep.subr.mxu0 0.0
        %673 = vmatpush1.msra.mxu0 0.0
        %674 = vmatprep.subr.mxu0 0.0
        %675 = vmatpush1.msra.mxu0 0.0
        %676 = vmatprep.subr.mxu0 0.0
        %677 = vmatpush1.msra.mxu0 0.0
        %678 = vmatprep.subr.mxu0 0.0
        %679 = vmatpush1.msra.mxu0 0.0
        %680 = vmatprep.subr.mxu0 0.0
        %681 = vmatpush1.msra.mxu0 0.0
        %682 = vmatprep.subr.mxu0 0.0
        %683 = vmatpush1.msra.mxu0 0.0
        %684 = vmatprep.subr.mxu0 0.0
        %685 = vmatpush1.msra.mxu0 0.0
        %686 = vmatprep.subr.mxu0 0.0
        %687 = vmatpush1.msra.mxu0 0.0
        %688 = vmatprep.subr.mxu0 0.0
        %689 = vmatpush1.msra.mxu0 0.0
        %690 = vmatprep.subr.mxu0 0.0
        %691 = vmatpush1.msra.mxu0 0.0
        %692 = vmatprep.subr.mxu0 0.0
        %693 = vmatpush1.msra.mxu0 0.0
        %694 = vmatprep.subr.mxu0 0.0
        %695 = vmatpush1.msra.mxu0 0.0
        %696 = vmatprep.subr.mxu0 0.0
        %697 = vmatpush1.msra.mxu0 0.0
        %698 = vmatprep.subr.mxu0 0.0
        %699 = vmatpush1.msra.mxu0 0.0
        %700 = vmatprep.subr.mxu0 0.0
        %701 = vmatpush1.msra.mxu0 0.0
        %702 = vmatprep.subr.mxu0 0.0
        %703 = vmatpush1.msra.mxu0 0.0
        %704 = vmatprep.subr.mxu0 0.0
        %705 = vmatpush1.msra.mxu0 0.0
        %706 = vmatprep.subr.mxu0 0.0
        %707 = vmatpush1.msra.mxu0 0.0
        %708 = vmatprep.mubr.f32.mxu0 0.0
        %709 = vmatmul.mubr.f32.gmra.mrb[0].mxu0 %v642
        %v710 = vpop.f32.mrb[0].mxu0
        %v711 = vadd.f32 %v639, %v710
        %v712 = vpop.f32.mrb[0].mxu0
        %713 = vdwg.mxu0
        %v714 = vld [vmem:[%s243] sm:$0x1]
        %v715 = vadd.f32 %v711, %v714
        %vm716 = vcmask 1040384
        %v717 = vsel %vm716, %v715, -inf
        %718 = vmax.xlane.f32.xlu0 %v717
        %v719 = vpop.xlane.xlu0 %718
        %v720 = vsub.f32 %v715, %v719
        %v721 = vmul.f32 %v720, 1.442695
        %v722 = vpow.pop %v721
        %v723 = vsel %vm716, %v722, 0.0
        %724 = vadd.xlane.f32.xlu0 %v723
        %v725 = vpop.xlane.xlu0 %724
        %v726 = vrcp.pop %v725
        %v727 = vmul.f32 %v725, %v726
        %v728 = vsub.f32 2.0, %v727
        %v729 = vmul.f32 %v726, %v728
        %v730 = vmul.f32 %v722, %v729
        %v731 = vlaneseq
        %v732 = vshrl.u32 %v731, 7
        %v733 = vsub.s32 0, %v732
        %v734 = vrot.slane %v730, %v733
        %v735 = vmul.f32 %v490, %v734
        %v736 = vmul.f32 %v495, %v734
        %v737 = vmul.f32 %v500, %v734
        %v738 = vmul.f32 %v505, %v734
        %739 = vadd.xlane.f32.xlu0 %v735
        %v740 = vpop.xlane.xlu0 %739
        %741 = vadd.xlane.f32.xlu0 %v736
        %v742 = vpop.xlane.xlu0 %741
        %743 = vadd.xlane.f32.xlu0 %v737
        %v744 = vpop.xlane.xlu0 %743
        %745 = vadd.xlane.f32.xlu0 %v738
        %v746 = vpop.xlane.xlu0 %745
        %747 = vrot.lane.b32.xlu0 %v266, 125
        %v748 = vpop.permute.xlu0 %747
        %749 = vrot.lane.b32.xlu0 %v267, 125
        %v750 = vpop.permute.xlu0 %749
        %751 = vrot.lane.b32.xlu0 %v268, 125
        %v752 = vpop.permute.xlu0 %751
        %753 = vrot.lane.b32.xlu0 %v269, 125
        %v754 = vpop.permute.xlu0 %753
        %v760 = vsel %vm410, %v260, 0
        %v763 = vsel %vm410, %v261, 0
        %v766 = vsel %vm410, %v262, 0
        %v769 = vsel %vm410, %v263, 0
        %771 = vmatprep.subr.mxu0 0.0
        %772 = vmatpush1.msra.mxu0 %v740
        %773 = vmatprep.subr.mxu0 0.0
        %774 = vmatpush1.msra.mxu0 %v742
        %775 = vmatprep.subr.mxu0 0.0
        %776 = vmatpush1.msra.mxu0 %v744
        %777 = vmatprep.subr.mxu0 0.0
        %778 = vmatpush1.msra.mxu0 %v746
        %779 = vmatprep.subr.mxu0 0.0
        %780 = vmatpush1.msra.mxu0 0.0
        %781 = vmatprep.subr.mxu0 0.0
        %782 = vmatpush1.msra.mxu0 0.0
        %783 = vmatprep.subr.mxu0 0.0
        %784 = vmatpush1.msra.mxu0 0.0
        %785 = vmatprep.subr.mxu0 0.0
        %786 = vmatpush1.msra.mxu0 0.0
        %787 = vmatprep.subr.mxu0 0.0
        %788 = vmatpush1.msra.mxu0 0.0
        %789 = vmatprep.subr.mxu0 0.0
        %790 = vmatpush1.msra.mxu0 0.0
        %791 = vmatprep.subr.mxu0 0.0
        %792 = vmatpush1.msra.mxu0 0.0
        %793 = vmatprep.subr.mxu0 0.0
        %794 = vmatpush1.msra.mxu0 0.0
        %795 = vmatprep.subr.mxu0 0.0
        %796 = vmatpush1.msra.mxu0 0.0
        %797 = vmatprep.subr.mxu0 0.0
        %798 = vmatpush1.msra.mxu0 0.0
        %799 = vmatprep.subr.mxu0 0.0
        %800 = vmatpush1.msra.mxu0 0.0
        %801 = vmatprep.subr.mxu0 0.0
        %802 = vmatpush1.msra.mxu0 0.0
        %803 = vmatprep.subr.mxu0 0.0
        %804 = vmatpush1.msra.mxu0 0.0
        %805 = vmatprep.subr.mxu0 0.0
        %806 = vmatpush1.msra.mxu0 0.0
        %807 = vmatprep.subr.mxu0 0.0
        %808 = vmatpush1.msra.mxu0 0.0
        %809 = vmatprep.subr.mxu0 0.0
        %810 = vmatpush1.msra.mxu0 0.0
        %811 = vmatprep.subr.mxu0 0.0
        %812 = vmatpush1.msra.mxu0 0.0
        %813 = vmatprep.subr.mxu0 0.0
        %814 = vmatpush1.msra.mxu0 0.0
        %815 = vmatprep.subr.mxu0 0.0
        %816 = vmatpush1.msra.mxu0 0.0
        %817 = vmatprep.subr.mxu0 0.0
        %818 = vmatpush1.msra.mxu0 0.0
        %819 = vmatprep.subr.mxu0 0.0
        %820 = vmatpush1.msra.mxu0 0.0
        %821 = vmatprep.subr.mxu0 0.0
        %822 = vmatpush1.msra.mxu0 0.0
        %823 = vmatprep.subr.mxu0 0.0
        %824 = vmatpush1.msra.mxu0 0.0
        %825 = vmatprep.subr.mxu0 0.0
        %826 = vmatpush1.msra.mxu0 0.0
        %827 = vmatprep.subr.mxu0 0.0
        %828 = vmatpush1.msra.mxu0 0.0
        %829 = vmatprep.subr.mxu0 0.0
        %830 = vmatpush1.msra.mxu0 0.0
        %831 = vmatprep.subr.mxu0 0.0
        %832 = vmatpush1.msra.mxu0 0.0
        %833 = vmatprep.subr.mxu0 0.0
        %834 = vmatpush1.msra.mxu0 0.0
        %835 = vmatprep.mubr.f32.mxu0 0.0
        %836 = vmatmul.mubr.f32.gmra.mrb[0].mxu0 %v760
        %v837 = vpop.f32.mrb[0].mxu0
        %v838 = vadd.f32 %v748, %v837
        %v839 = vpop.f32.mrb[0].mxu0
        %840 = vmatprep.mubr.f32.mxu0 0.0
        %841 = vmatmul.mubr.f32.gmra.mrb[0].mxu0 %v763
        %v842 = vpop.f32.mrb[0].mxu0
        %v843 = vadd.f32 %v750, %v842
        %v844 = vpop.f32.mrb[0].mxu0
        %845 = vmatprep.mubr.f32.mxu0 0.0
        %846 = vmatmul.mubr.f32.gmra.mrb[0].mxu0 %v766
        %v847 = vpop.f32.mrb[0].mxu0
        %v848 = vadd.f32 %v752, %v847
        %v849 = vpop.f32.mrb[0].mxu0
        %850 = vmatprep.mubr.f32.mxu0 0.0
        %851 = vmatmul.mubr.f32.gmra.mrb[0].mxu0 %v769
        %v852 = vpop.f32.mrb[0].mxu0
        %v853 = vadd.f32 %v754, %v852
        %v854 = vpop.f32.mrb[0].mxu0
        %855 = vdwg.mxu0
        %v856 = vmax.f32 %v838, 0.0
        %v857 = vmax.f32 %v843, 0.0
        %v858 = vmax.f32 %v848, 0.0
        %v859 = vmax.f32 %v853, 0.0
        %v860 = vrot.slane %v266, 1
        %861 = vrot.lane.b32.xlu0 %v860, 124
        %v862 = vpop.permute.xlu0 %861
        %v865 = vsel %vm410, %v265, 0
        %867 = vmatprep.subr.mxu0 0.0
        %868 = vmatpush1.msra.mxu0 %v856
        %869 = vmatprep.subr.mxu0 0.0
        %870 = vmatpush1.msra.mxu0 %v857
        %871 = vmatprep.subr.mxu0 0.0
        %872 = vmatpush1.msra.mxu0 %v858
        %873 = vmatprep.subr.mxu0 0.0
        %874 = vmatpush1.msra.mxu0 %v859
        %875 = vmatprep.subr.mxu0 0.0
        %876 = vmatpush1.msra.mxu0 0.0
        %877 = vmatprep.subr.mxu0 0.0
        %878 = vmatpush1.msra.mxu0 0.0
        %879 = vmatprep.subr.mxu0 0.0
        %880 = vmatpush1.msra.mxu0 0.0
        %881 = vmatprep.subr.mxu0 0.0
        %882 = vmatpush1.msra.mxu0 0.0
        %883 = vmatprep.subr.mxu0 0.0
        %884 = vmatpush1.msra.mxu0 0.0
        %885 = vmatprep.subr.mxu0 0.0
        %886 = vmatpush1.msra.mxu0 0.0
        %887 = vmatprep.subr.mxu0 0.0
        %888 = vmatpush1.msra.mxu0 0.0
        %889 = vmatprep.subr.mxu0 0.0
        %890 = vmatpush1.msra.mxu0 0.0
        %891 = vmatprep.subr.mxu0 0.0
        %892 = vmatpush1.msra.mxu0 0.0
        %893 = vmatprep.subr.mxu0 0.0
        %894 = vmatpush1.msra.mxu0 0.0
        %895 = vmatprep.subr.mxu0 0.0
        %896 = vmatpush1.msra.mxu0 0.0
        %897 = vmatprep.subr.mxu0 0.0
        %898 = vmatpush1.msra.mxu0 0.0
        %899 = vmatprep.subr.mxu0 0.0
        %900 = vmatpush1.msra.mxu0 0.0
        %901 = vmatprep.subr.mxu0 0.0
        %902 = vmatpush1.msra.mxu0 0.0
        %903 = vmatprep.subr.mxu0 0.0
        %904 = vmatpush1.msra.mxu0 0.0
        %905 = vmatprep.subr.mxu0 0.0
        %906 = vmatpush1.msra.mxu0 0.0
        %907 = vmatprep.subr.mxu0 0.0
        %908 = vmatpush1.msra.mxu0 0.0
        %909 = vmatprep.subr.mxu0 0.0
        %910 = vmatpush1.msra.mxu0 0.0
        %911 = vmatprep.subr.mxu0 0.0
        %912 = vmatpush1.msra.mxu0 0.0
        %913 = vmatprep.subr.mxu0 0.0
        %914 = vmatpush1.msra.mxu0 0.0
        %915 = vmatprep.subr.mxu0 0.0
        %916 = vmatpush1.msra.mxu0 0.0
        %917 = vmatprep.subr.mxu0 0.0
        %918 = vmatpush1.msra.mxu0 0.0
        %919 = vmatprep.subr.mxu0 0.0
        %920 = vmatpush1.msra.mxu0 0.0
        %921 = vmatprep.subr.mxu0 0.0
        %922 = vmatpush1.msra.mxu0 0.0
        %923 = vmatprep.subr.mxu0 0.0
        %924 = vmatpush1.msra.mxu0 0.0
        %925 = vmatprep.subr.mxu0 0.0
        %926 = vmatpush1.msra.mxu0 0.0
        %927 = vmatprep.subr.mxu0 0.0
        %928 = vmatpush1.msra.mxu0 0.0
        %929 = vmatprep.subr.mxu0 0.0
        %930 = vmatpush1.msra.mxu0 0.0
        %931 = vmatprep.mubr.f32.mxu0 0.0
        %932 = vmatmul.mubr.f32.gmra.mrb[0].mxu0 %v865
        %v933 = vpop.f32.mrb[0].mxu0
        %v934 = vadd.f32 %v862, %v933
        %v935 = vpop.f32.mrb[0].mxu0
        %936 = vdwg.mxu0
        %938 = vset.pattern.permute.xlu0 0
        %939 = vperm.xlu0 %938, %v934
        %v940 = vpop.permute.xlu0 %939
        %v941 = vrot.slane %v940, 7
        %v943 = vsel %vm716, %v730, %v941
        %944 = vst [vmem:[%s247] sm:$0x3] %v943
        %p945 = scmp.lt.s32.totalorder %s15, 1
        %s946 = scalar_select %p945, %s15, 1
        %s947 = smul.addr %s946, 2
        %s948 = scalar_lea.vmem %s4, %s947
        // Predicated region
        $region75: #{attention_mil_forward.1} parent=69 // pred_check
          %p949 = pneg %p127
        $region76: #{attention_mil_forward.1} parent=69 // pred_check_branch
          %951 = sbr.rel (%p949) target = $region78
        $region77: #{attention_mil_forward.1} parent=69 // pred_region
          _
        $region78: #{attention_mil_forward.1} parent=69 // pred_fallthru
          _
      $region70: #{attention_mil_forward.1} parent=5 // pred_fallthru
        _
      %p952 = scmp.le.s32.totalorder 2, %s10
      // Predicated region
      $region79: #{attention_mil_forward.1} parent=5 // pred_check
        %p953 = pneg %p952
      $region80: #{attention_mil_forward.1} parent=5 // pred_check_branch
        %955 = sbr.rel (%p953) target = $region82
      $region81: #{attention_mil_forward.1} parent=5 // pred_region
        %s956 = ssub.s32 %s10, 2
        // Predicated region
        $region83: #{attention_mil_forward.1} parent=81 // pred_check
          %p957 = pneg %p133
        $region84: #{attention_mil_forward.1} parent=81 // pred_check_branch
          %959 = sbr.rel (%p957) target = $region86
        $region85: #{attention_mil_forward.1} parent=81 // pred_region
          %p960 = scmp.lt.s32.totalorder %s16, 1
          %s961 = scalar_select %p960, %s16, 1
          %s962 = smul.addr %s961, 2
          %s963 = scalar_lea.vmem %s4, %s962
        $region86: #{attention_mil_forward.1} parent=81 // pred_fallthru
          _
      $region82: #{attention_mil_forward.1} parent=5 // pred_fallthru
        _
    $region6: #{attention_mil_forward.1} parent=1 // loop_footer
      %s14 = sadd.s32 1, %s10
    $region7: #{attention_mil_forward.1} parent=1 // loop_footer_branch
      %9 = sbr.rel target = $region3
    $region8: #{attention_mil_forward.1} parent=1 // loop_exit
      _

</llo_original>
